<compile_context>
chip_gen: v6e
topology: v6e:2x2x1
jax: 0.10.0
libtpu: 0.0.40
codegen_flags: <defaults>
</compile_context>

<pallas_src>
import jax
import jax.numpy as jnp
from jax.experimental import pallas as pl
from jax.experimental.pallas import tpu as pltpu


# --------------------------------------------------------------------------
# Kernel
# --------------------------------------------------------------------------
def _attention_gate_kernel(g_ref, s_ref,
                           wg_ref, ws_ref, bh_ref,
                           wo_ref, bo_ref,
                           out_ref):
    # g_ref: (Cg, T), s_ref: (Cs, T), out_ref: (Co, T) with Co == Cs.
    # Weights: wg (Co, Cg), ws (Co, Cs), wo (Co, Co); biases (Co, 1).
    g = g_ref[...]                       # native dtype straight into the MXU
    s = s_ref[...]

    # branch convs (BN scale pre-folded into the weights), f32 accumulation
    xg = jnp.dot(wg_ref[...], g, preferred_element_type=jnp.float32)
    xs = jnp.dot(ws_ref[...], s, preferred_element_type=jnp.float32)

    # folded (shift_g + shift_s) bias + ReLU
    h = jnp.maximum(xg + xs + bh_ref[...], 0.0)

    # output conv + sigmoid (EUP) — keep everything f32 until the final store
    o = jnp.dot(wo_ref[...], h.astype(wo_ref.dtype),
                preferred_element_type=jnp.float32)
    att = jax.nn.sigmoid(o + bo_ref[...])

    # gate the skip connection; single fused lane-dense store
    out_ref[...] = (att * s.astype(jnp.float32)).astype(out_ref.dtype)


# --------------------------------------------------------------------------
# Wrapper
# --------------------------------------------------------------------------
def _pick_tile_hw(hw, max_tile=8192):
    """Largest lane-dense tile (multiple of 128) that divides hw, else full hw."""
    for cand in (8192, 4096, 2048, 1024, 512, 256, 128):
        if cand <= max_tile and hw % cand == 0:
            return cand
    return hw  # full extent: legal block shape even if not a multiple of 128


def attention_gate_pallas(g_nchw, s_nchw, params, *, max_tile_hw=8192):
    """g_nchw: (N, Cg, H, W), s_nchw: (N, Cs, H, W). Returns (N, Cs, H, W)."""
    N, Cg, H, W = g_nchw.shape
    _, Cs, _, _ = s_nchw.shape
    Co = params["wg"].shape[0]
    assert Co == Cs, "out * s requires out_c == in_c[1]"

    HW = H * W
    # NCHW -> (N, C, H*W) is a free reshape (no transpose, no extra HBM pass)
    g3 = g_nchw.reshape(N, Cg, HW)
    s3 = s_nchw.reshape(N, Cs, HW)

    tile_hw = _pick_tile_hw(HW, max_tile_hw)
    grid = (N, HW // tile_hw)

    def pix_spec(c):
        # (batch squeezed, all channels, lane-dense pixel tile)
        return pl.BlockSpec((None, c, tile_hw), lambda n, t: (n, 0, t))

    def full_spec(r, c):
        return pl.BlockSpec((r, c), lambda n, t: (0, 0))

    out3 = pl.pallas_call(
        _attention_gate_kernel,
        out_shape=jax.ShapeDtypeStruct((N, Cs, HW), s3.dtype),
        grid_spec=pltpu.PrefetchScalarGridSpec(
            num_scalar_prefetch=0,
            grid=grid,
            in_specs=[
                pix_spec(Cg),          # g tile  (Cg, T)
                pix_spec(Cs),          # s tile  (Cs, T)
                full_spec(Co, Cg),     # wg (BN scale folded)
                full_spec(Co, Cs),     # ws (BN scale folded)
                full_spec(Co, 1),      # bias_h = shift_g + shift_s
                full_spec(Co, Co),     # wo
                full_spec(Co, 1),      # bo
            ],
            out_specs=pix_spec(Cs),
        ),
        compiler_params=pltpu.CompilerParams(
            dimension_semantics=("parallel", "parallel")),
    )(g3, s3,
      params["wg"], params["ws"], params["bh"],
      params["wo"], params["bo"])

    return out3.reshape(N, Cs, H, W)


# --------------------------------------------------------------------------
# Parameters (raw PyTorch-style + folded kernel form)
# --------------------------------------------------------------------------
def make_params(key, in_c, out_c, eps=1e-5):
    """Deterministic synthetic params.  Returns (raw, folded):
       raw    : PyTorch-style conv weights/biases + BN stats (for the reference)
       folded : BN(eval) + conv bias folded into weights / per-channel biases."""
    cg, cs = in_c
    ks = jax.random.split(key, 14)

    def conv_w(k, cout, cin):
        # PyTorch Conv2d 1x1 weight (cout, cin, 1, 1) -> used here as (cout, cin)
        return jax.random.normal(k, (cout, cin), jnp.float32) * 0.1

    wg_w = conv_w(ks[0], out_c, cg)
    wg_b = jax.random.normal(ks[1], (out_c,), jnp.float32) * 0.1
    g_gamma = 1.0 + 0.1 * jax.random.normal(ks[2], (out_c,), jnp.float32)
    g_beta = 0.1 * jax.random.normal(ks[3], (out_c,), jnp.float32)
    g_mean = 0.1 * jax.random.normal(ks[4], (out_c,), jnp.float32)
    g_var = jnp.abs(jax.random.normal(ks[5], (out_c,), jnp.float32)) + 0.5

    ws_w = conv_w(ks[6], out_c, cs)
    ws_b = jax.random.normal(ks[7], (out_c,), jnp.float32) * 0.1
    s_gamma = 1.0 + 0.1 * jax.random.normal(ks[8], (out_c,), jnp.float32)
    s_beta = 0.1 * jax.random.normal(ks[9], (out_c,), jnp.float32)
    s_mean = 0.1 * jax.random.normal(ks[10], (out_c,), jnp.float32)
    s_var = jnp.abs(jax.random.normal(ks[11], (out_c,), jnp.float32)) + 0.5

    wo_w = conv_w(ks[12], out_c, out_c)
    wo_b = jax.random.normal(ks[13], (out_c,), jnp.float32) * 0.1

    raw = dict(wg_w=wg_w, wg_b=wg_b, g_gamma=g_gamma, g_beta=g_beta,
               g_mean=g_mean, g_var=g_var,
               ws_w=ws_w, ws_b=ws_b, s_gamma=s_gamma, s_beta=s_beta,
               s_mean=s_mean, s_var=s_var,
               wo_w=wo_w, wo_b=wo_b, eps=eps)

    # fold BN(eval) + conv bias:  BN(Wx + b) = (scale*W) x + (beta + scale*(b - mean))
    scale_g = g_gamma / jnp.sqrt(g_var + eps)
    shift_g = g_beta + scale_g * (wg_b - g_mean)
    scale_s = s_gamma / jnp.sqrt(s_var + eps)
    shift_s = s_beta + scale_s * (ws_b - s_mean)

    folded = dict(
        wg=scale_g[:, None] * wg_w,                     # (Co, Cg)
        ws=scale_s[:, None] * ws_w,                     # (Co, Cs)
        bh=(shift_g + shift_s).reshape(out_c, 1),       # (Co, 1)
        wo=wo_w,                                        # (Co, Co)
        bo=wo_b.reshape(out_c, 1),                      # (Co, 1)
    )
    return raw, folded


# --------------------------------------------------------------------------
# Pure-JAX reference (mirrors the PyTorch module exactly, unfolded BN)
# --------------------------------------------------------------------------
def attention_gate_reference(g, s, raw):
    eps = raw["eps"]

    def conv_bn(x, w, b, gamma, beta, mean, var):
        y = jnp.einsum('oc,nchw->nohw', w, x) + b[None, :, None, None]
        y = (y - mean[None, :, None, None]) / jnp.sqrt(var[None, :, None, None] + eps)
        return gamma[None, :, None, None] * y + beta[None, :, None, None]

    xg = conv_bn(g, raw["wg_w"], raw["wg_b"], raw["g_gamma"], raw["g_beta"],
                 raw["g_mean"], raw["g_var"])
    xs = conv_bn(s, raw["ws_w"], raw["ws_b"], raw["s_gamma"], raw["s_beta"],
                 raw["s_mean"], raw["s_var"])
    h = jnp.maximum(xg + xs, 0.0)
    o = jnp.einsum('oc,nchw->nohw', raw["wo_w"], h) + raw["wo_b"][None, :, None, None]
    att = jax.nn.sigmoid(o)
    return att * s


# --------------------------------------------------------------------------
if __name__ == "__main__":
    # in_c = (Cg, Cs); out_c must equal Cs so `out * s` broadcasts as in PyTorch
    in_c = (4, 8)
    out_c = 8
    N, H, W = 2, 16, 16

    key = jax.random.PRNGKey(0)
    kg, ks, kp = jax.random.split(key, 3)
    g = jax.random.normal(kg, (N, in_c[0], H, W), jnp.float32)
    s = jax.random.normal(ks, (N, in_c[1], H, W), jnp.float32)
    raw, folded = make_params(kp, in_c, out_c)

    out = attention_gate_pallas(g, s, folded)
    out = jax.block_until_ready(out)

    ref = attention_gate_reference(g, s, raw)
    assert out.shape == (N, in_c[1], H, W)
    assert jnp.allclose(out, ref, atol=1e-5, rtol=1e-4), "mismatch vs reference"

    print("KERNEL_OK")
</pallas_src>

<mosaic_0001>
module attributes {stable_mosaic.version = 11 : i64} {
  func.func @_attention_gate_kernel(%arg0: i32, %arg1: i32, %arg2: memref<1x4x256xf32, #tpu.memory_space<vmem>>, %arg3: memref<1x8x256xf32, #tpu.memory_space<vmem>>, %arg4: memref<8x4xf32, #tpu.memory_space<vmem>>, %arg5: memref<8x8xf32, #tpu.memory_space<vmem>>, %arg6: memref<8x1xf32, #tpu.memory_space<vmem>>, %arg7: memref<8x8xf32, #tpu.memory_space<vmem>>, %arg8: memref<8x1xf32, #tpu.memory_space<vmem>>, %arg9: memref<1x8x256xf32, #tpu.memory_space<vmem>>) attributes {dimension_semantics = [#tpu.dimension_semantics<parallel>, #tpu.dimension_semantics<parallel>], iteration_bounds = array<i64: 2, 1>, scalar_prefetch = 0 : i64, scratch_operands = 0 : i64, tpu.core_type = #tpu.core_type<tc>, window_params = [{transform_indices = @transform_0, window_bounds = array<i64: 1, 4, 256>}, {transform_indices = @transform_1, window_bounds = array<i64: 1, 8, 256>}, {pipeline_mode = #tpu.pipeline_mode<synchronous>, transform_indices = @transform_2, window_bounds = array<i64: 8, 4>}, {pipeline_mode = #tpu.pipeline_mode<synchronous>, transform_indices = @transform_3, window_bounds = array<i64: 8, 8>}, {pipeline_mode = #tpu.pipeline_mode<synchronous>, transform_indices = @transform_4, window_bounds = array<i64: 8, 1>}, {pipeline_mode = #tpu.pipeline_mode<synchronous>, transform_indices = @transform_5, window_bounds = array<i64: 8, 8>}, {pipeline_mode = #tpu.pipeline_mode<synchronous>, transform_indices = @transform_6, window_bounds = array<i64: 8, 1>}, {transform_indices = @transform_7, window_bounds = array<i64: 1, 8, 256>}]} {
    %c0 = arith.constant 0 : index
    %c0_0 = arith.constant 0 : index
    %c0_1 = arith.constant 0 : index
    %0 = vector.load %arg2[%c0, %c0_0, %c0_1] : memref<1x4x256xf32, #tpu.memory_space<vmem>>, vector<1x4x256xf32>
    %1 = vector.shape_cast %0 : vector<1x4x256xf32> to vector<4x256xf32>
    %c0_2 = arith.constant 0 : index
    %c0_3 = arith.constant 0 : index
    %c0_4 = arith.constant 0 : index
    %2 = vector.load %arg3[%c0_2, %c0_3, %c0_4] : memref<1x8x256xf32, #tpu.memory_space<vmem>>, vector<1x8x256xf32>
    %3 = vector.shape_cast %2 : vector<1x8x256xf32> to vector<8x256xf32>
    %c0_5 = arith.constant 0 : index
    %c0_6 = arith.constant 0 : index
    %4 = vector.load %arg4[%c0_5, %c0_6] : memref<8x4xf32, #tpu.memory_space<vmem>>, vector<8x4xf32>
    %cst = arith.constant dense<0.000000e+00> : vector<8x256xf32>
    %5 = tpu.matmul %4, %1, %cst {dimension_numbers = #tpu.dot_dimension_numbers<[1], [0], [0], [1], [0, 0, 1, 1], [], []>} : vector<8x4xf32>, vector<4x256xf32>, vector<8x256xf32> -> vector<8x256xf32>
    %c0_7 = arith.constant 0 : index
    %c0_8 = arith.constant 0 : index
    %6 = vector.load %arg5[%c0_7, %c0_8] : memref<8x8xf32, #tpu.memory_space<vmem>>, vector<8x8xf32>
    %cst_9 = arith.constant dense<0.000000e+00> : vector<8x256xf32>
    %7 = tpu.matmul %6, %3, %cst_9 {dimension_numbers = #tpu.dot_dimension_numbers<[1], [0], [0], [1], [0, 0, 1, 1], [], []>} : vector<8x8xf32>, vector<8x256xf32>, vector<8x256xf32> -> vector<8x256xf32>
    %8 = arith.addf %5, %7 : vector<8x256xf32>
    %c0_10 = arith.constant 0 : index
    %c0_11 = arith.constant 0 : index
    %9 = vector.load %arg6[%c0_10, %c0_11] : memref<8x1xf32, #tpu.memory_space<vmem>>, vector<8x1xf32>
    %10 = vector.broadcast %9 : vector<8x1xf32> to vector<8x256xf32>
    %11 = arith.addf %8, %10 : vector<8x256xf32>
    %cst_12 = arith.constant 0.000000e+00 : f32
    %12 = vector.broadcast %cst_12 : f32 to vector<8x256xf32>
    %13 = arith.maximumf %11, %12 : vector<8x256xf32>
    %c0_13 = arith.constant 0 : index
    %c0_14 = arith.constant 0 : index
    %14 = vector.load %arg7[%c0_13, %c0_14] : memref<8x8xf32, #tpu.memory_space<vmem>>, vector<8x8xf32>
    %cst_15 = arith.constant dense<0.000000e+00> : vector<8x256xf32>
    %15 = tpu.matmul %14, %13, %cst_15 {dimension_numbers = #tpu.dot_dimension_numbers<[1], [0], [0], [1], [0, 0, 1, 1], [], []>} : vector<8x8xf32>, vector<8x256xf32>, vector<8x256xf32> -> vector<8x256xf32>
    %c0_16 = arith.constant 0 : index
    %c0_17 = arith.constant 0 : index
    %16 = vector.load %arg8[%c0_16, %c0_17] : memref<8x1xf32, #tpu.memory_space<vmem>>, vector<8x1xf32>
    %17 = vector.broadcast %16 : vector<8x1xf32> to vector<8x256xf32>
    %18 = arith.addf %15, %17 : vector<8x256xf32>
    %19 = arith.negf %18 : vector<8x256xf32>
    %20 = math.exp %19 : vector<8x256xf32>
    %cst_18 = arith.constant 1.000000e+00 : f32
    %21 = vector.broadcast %cst_18 : f32 to vector<8x256xf32>
    %22 = arith.addf %21, %20 : vector<8x256xf32>
    %23 = arith.divf %21, %22 : vector<8x256xf32>
    %24 = arith.mulf %23, %3 : vector<8x256xf32>
    %c0_19 = arith.constant 0 : index
    %c0_20 = arith.constant 0 : index
    %c0_21 = arith.constant 0 : index
    %25 = vector.load %arg9[%c0_19, %c0_20, %c0_21] : memref<1x8x256xf32, #tpu.memory_space<vmem>>, vector<1x8x256xf32>
    %26 = vector.shape_cast %25 : vector<1x8x256xf32> to vector<8x256xf32>
    %27 = vector.shape_cast %24 : vector<8x256xf32> to vector<1x8x256xf32>
    tpu.vector_store %arg9[%c0_19, %c0_20, %c0_21], %27 {strides = array<i32>} : memref<1x8x256xf32, #tpu.memory_space<vmem>>, vector<1x8x256xf32>,
    return
  }
  func.func @transform_0(%arg0: i32, %arg1: i32) -> (i32, i32, i32) {
    %c0_i32 = arith.constant 0 : i32
    %c0_i32_0 = arith.constant 0 : i32
    return %arg0, %c0_i32, %arg1 : i32, i32, i32
  }
  func.func @transform_1(%arg0: i32, %arg1: i32) -> (i32, i32, i32) {
    %c0_i32 = arith.constant 0 : i32
    %c0_i32_0 = arith.constant 0 : i32
    return %arg0, %c0_i32, %arg1 : i32, i32, i32
  }
  func.func @transform_2(%arg0: i32, %arg1: i32) -> (i32, i32) {
    %c0_i32 = arith.constant 0 : i32
    %c0_i32_0 = arith.constant 0 : i32
    %c0_i32_1 = arith.constant 0 : i32
    return %c0_i32, %c0_i32_0 : i32, i32
  }
  func.func @transform_3(%arg0: i32, %arg1: i32) -> (i32, i32) {
    %c0_i32 = arith.constant 0 : i32
    %c0_i32_0 = arith.constant 0 : i32
    %c0_i32_1 = arith.constant 0 : i32
    return %c0_i32, %c0_i32_0 : i32, i32
  }
  func.func @transform_4(%arg0: i32, %arg1: i32) -> (i32, i32) {
    %c0_i32 = arith.constant 0 : i32
    %c0_i32_0 = arith.constant 0 : i32
    %c0_i32_1 = arith.constant 0 : i32
    return %c0_i32, %c0_i32_0 : i32, i32
  }
  func.func @transform_5(%arg0: i32, %arg1: i32) -> (i32, i32) {
    %c0_i32 = arith.constant 0 : i32
    %c0_i32_0 = arith.constant 0 : i32
    %c0_i32_1 = arith.constant 0 : i32
    return %c0_i32, %c0_i32_0 : i32, i32
  }
  func.func @transform_6(%arg0: i32, %arg1: i32) -> (i32, i32) {
    %c0_i32 = arith.constant 0 : i32
    %c0_i32_0 = arith.constant 0 : i32
    %c0_i32_1 = arith.constant 0 : i32
    return %c0_i32, %c0_i32_0 : i32, i32
  }
  func.func @transform_7(%arg0: i32, %arg1: i32) -> (i32, i32, i32) {
    %c0_i32 = arith.constant 0 : i32
    %c0_i32_0 = arith.constant 0 : i32
    return %arg0, %c0_i32, %arg1 : i32, i32, i32
  }
}

</mosaic_0001>

<llo_original>
// kernel: tpu_custom_call.1
$region0: #{tpu_custom_call.1}
  #allocation0 [shape = 'u32[]', space=smem, size = 0x4, offset = 0x4, fixed_abs, tag = 'smem constant byte address 0x4 - core index']
  #allocation1 [shape = 'u32[144,128]{1,0:T(1,128)}', space=vmem, size = 0x12000, scoped, tag = 'internal scratch']
  %s0 = inlined_call_operand.vmem [shape: f32[2,4,256], index: 0, kind: input, shape index: {}]
  %s1 = inlined_call_operand.hbm [shape: f32[2,8,256], index: 1, kind: input, shape index: {}]
  %s2 = inlined_call_operand.vmem [shape: f32[8,4], index: 2, kind: input, shape index: {}]
  %s3 = inlined_call_operand.vmem [shape: f32[8,8], index: 3, kind: input, shape index: {}]
  %s4 = inlined_call_operand.vmem [shape: f32[8,1], index: 4, kind: input, shape index: {}]
  %s5 = inlined_call_operand.vmem [shape: f32[8,8], index: 5, kind: input, shape index: {}]
  %s6 = inlined_call_operand.vmem [shape: f32[8,1], index: 6, kind: input, shape index: {}]
  %s7 = inlined_call_operand.hbm [shape: f32[2,8,256], index: 7, kind: output, shape index: {}]
  %s8 = sld [smem:[#allocation0]]
  $region65: #{tpu_custom_call.1} parent=0
    _
  %s10 = ssub.s32 1, %s8
  %s11 = scalar_select 0, %s10, %s8
  $region1: #{tpu_custom_call.1} parent=0
    #allocation2 [shape = 'u8[16384]{0}', space=vmem, size = 0x4000, scoped, tag = 'input window, operand 1']
    #allocation3 [shape = 's32[2]{0}', space=sflag, size = 0x8, scoped, tag = 'scoped memory for tpu_custom_call.1']
    #allocation4 [shape = 's32[2]{0}', space=sflag, size = 0x8, scoped, tag = 'scoped memory for tpu_custom_call.1']
    #allocation5 [shape = 'u8[16384]{0}', space=vmem, size = 0x4000, scoped, tag = 'output window, operand 0']
    %12 = vsyncpa [#allocation3], 0
    %s13 = scalar_lea.sflag [#allocation3], 1
    %14 = vsyncpa %s13, 0
    %15 = vsyncpa [#allocation4], 0
    %s16 = scalar_lea.sflag [#allocation4], 1
    %17 = vsyncpa %s16, 0
    loop: start=0, step=1, limit=4
    $region2: #{tpu_custom_call.1} parent=1 // loop_pre_header
      _
    $region3: #{tpu_custom_call.1} parent=1 // loop_header
      %s19 = sphi 0, %s23
      %p20 = scmp.ge.s32.totalorder %s19, 4
      %s26 = sphi 0, %s38
      %s27 = sphi 0, %s34
      %s28 = sphi 0, %s26
      %s29 = sphi 0, %s27
      %s30 = sphi 0, %s28
      %s31 = sphi 0, %s29
      %s43 = sphi 0, %s45
      %s46 = sphi 0, %s43
      %s47 = sphi 0, %s46
      %s63 = sphi 0, %s47
      %s71 = sphi 0, %s73
      %s74 = sphi 0, %s71
      %s75 = sphi 0, %s74
      %s91 = sphi 0, %s75
      %s95 = sphi 0, %s95
      %s97 = sphi 0, %s95
      %s98 = sphi 0, %s97
      %s112 = sphi 0, %s98
      %s116 = sphi 0, %s116
      %s118 = sphi 0, %s116
      %s119 = sphi 0, %s118
      %s133 = sphi 0, %s119
      %s137 = sphi 0, %s137
      %s139 = sphi 0, %s137
      %s140 = sphi 0, %s139
      %s154 = sphi 0, %s140
      %s158 = sphi 0, %s158
      %s160 = sphi 0, %s158
      %s161 = sphi 0, %s160
      %s175 = sphi 0, %s161
      %s179 = sphi 0, %s179
      %s181 = sphi 0, %s179
      %s182 = sphi 0, %s181
      %s196 = sphi 0, %s182
      %s204 = sphi 0, %s206
      %s207 = sphi 0, %s204
      %s208 = sphi 0, %s207
      %s224 = sphi 0, %s208
    $region4: #{tpu_custom_call.1} parent=1 // loop_header_branch
      %22 = sbr.rel (%p20) target = $region8
    $region5: #{tpu_custom_call.1} parent=1 // loop_body
      %s24 = ssub.s32 %s19, 1
      %s25 = ssub.s32 %s19, 2
      %s32 = sadd.s32 1, %s27
      %p33 = scmp.ge.s32.totalorder %s32, 1
      %s34 = scalar_select %p33, 0, %s32
      %s35 = sadd.s32 1, %s26
      %s36 = scalar_select %p33, %s35, %s26
      %p37 = scmp.ge.s32.totalorder %s36, 2
      %s38 = scalar_select %p37, 0, %s36
      %s39 = ssub.s32 %s26, %s38
      %s40 = ssub.s32 %s27, %s34
      %s41 = sor.u32 %s39, %s40
      %p42 = scmp.eq.s32.totalorder %s41, 0
      %s44 = sadd.s32 %s43, 1
      %s45 = scalar_select %p42, %s43, %s44
      %p48 = pneg %p42
      %p49 = scmp.eq.s32.totalorder %s19, 1
      %p50 = por %p48, %p49
      %p51 = scmp.ne.s32.totalorder %s43, %s46
      %p52 = scmp.eq.s32.totalorder %s19, 0
      %p53 = por %p51, %p52
      %p54 = scmp.ne.s32.totalorder %s43, %s46
      %p55 = scmp.eq.s32.totalorder %s24, 1
      %p56 = por %p54, %p55
      %p57 = scmp.ne.s32.totalorder %s46, %s47
      %p58 = scmp.eq.s32.totalorder %s24, 0
      %p59 = por %p57, %p58
      %p60 = scmp.ne.s32.totalorder %s46, %s47
      %p61 = scmp.eq.s32.totalorder %s25, 1
      %p62 = por %p60, %p61
      %p64 = scmp.ne.s32.totalorder %s47, %s63
      %p65 = scmp.eq.s32.totalorder %s25, 0
      %p66 = por %p64, %p65
      %s67 = ssub.s32 %s26, %s38
      %s68 = ssub.s32 %s27, %s34
      %s69 = sor.u32 %s67, %s68
      %p70 = scmp.eq.s32.totalorder %s69, 0
      %s72 = sadd.s32 %s71, 1
      %s73 = scalar_select %p70, %s71, %s72
      %p76 = pneg %p70
      %p77 = scmp.eq.s32.totalorder %s19, 1
      %p78 = por %p76, %p77
      %p79 = scmp.ne.s32.totalorder %s71, %s74
      %p80 = scmp.eq.s32.totalorder %s19, 0
      %p81 = por %p79, %p80
      %p82 = scmp.ne.s32.totalorder %s71, %s74
      %p83 = scmp.eq.s32.totalorder %s24, 1
      %p84 = por %p82, %p83
      %p85 = scmp.ne.s32.totalorder %s74, %s75
      %p86 = scmp.eq.s32.totalorder %s24, 0
      %p87 = por %p85, %p86
      %p88 = scmp.ne.s32.totalorder %s74, %s75
      %p89 = scmp.eq.s32.totalorder %s25, 1
      %p90 = por %p88, %p89
      %p92 = scmp.ne.s32.totalorder %s75, %s91
      %p93 = scmp.eq.s32.totalorder %s25, 0
      %p94 = por %p92, %p93
      %s96 = sadd.s32 %s95, 1
      %p99 = scmp.eq.s32.totalorder %s19, 1
      %p100 = scmp.ne.s32.totalorder %s95, %s97
      %p101 = scmp.eq.s32.totalorder %s19, 0
      %p102 = por %p100, %p101
      %p103 = scmp.ne.s32.totalorder %s95, %s97
      %p104 = scmp.eq.s32.totalorder %s24, 1
      %p105 = por %p103, %p104
      %p106 = scmp.ne.s32.totalorder %s97, %s98
      %p107 = scmp.eq.s32.totalorder %s24, 0
      %p108 = por %p106, %p107
      %p109 = scmp.ne.s32.totalorder %s97, %s98
      %p110 = scmp.eq.s32.totalorder %s25, 1
      %p111 = por %p109, %p110
      %p113 = scmp.ne.s32.totalorder %s98, %s112
      %p114 = scmp.eq.s32.totalorder %s25, 0
      %p115 = por %p113, %p114
      %s117 = sadd.s32 %s116, 1
      %p120 = scmp.eq.s32.totalorder %s19, 1
      %p121 = scmp.ne.s32.totalorder %s116, %s118
      %p122 = scmp.eq.s32.totalorder %s19, 0
      %p123 = por %p121, %p122
      %p124 = scmp.ne.s32.totalorder %s116, %s118
      %p125 = scmp.eq.s32.totalorder %s24, 1
      %p126 = por %p124, %p125
      %p127 = scmp.ne.s32.totalorder %s118, %s119
      %p128 = scmp.eq.s32.totalorder %s24, 0
      %p129 = por %p127, %p128
      %p130 = scmp.ne.s32.totalorder %s118, %s119
      %p131 = scmp.eq.s32.totalorder %s25, 1
      %p132 = por %p130, %p131
      %p134 = scmp.ne.s32.totalorder %s119, %s133
      %p135 = scmp.eq.s32.totalorder %s25, 0
      %p136 = por %p134, %p135
      %s138 = sadd.s32 %s137, 1
      %p141 = scmp.eq.s32.totalorder %s19, 1
      %p142 = scmp.ne.s32.totalorder %s137, %s139
      %p143 = scmp.eq.s32.totalorder %s19, 0
      %p144 = por %p142, %p143
      %p145 = scmp.ne.s32.totalorder %s137, %s139
      %p146 = scmp.eq.s32.totalorder %s24, 1
      %p147 = por %p145, %p146
      %p148 = scmp.ne.s32.totalorder %s139, %s140
      %p149 = scmp.eq.s32.totalorder %s24, 0
      %p150 = por %p148, %p149
      %p151 = scmp.ne.s32.totalorder %s139, %s140
      %p152 = scmp.eq.s32.totalorder %s25, 1
      %p153 = por %p151, %p152
      %p155 = scmp.ne.s32.totalorder %s140, %s154
      %p156 = scmp.eq.s32.totalorder %s25, 0
      %p157 = por %p155, %p156
      %s159 = sadd.s32 %s158, 1
      %p162 = scmp.eq.s32.totalorder %s19, 1
      %p163 = scmp.ne.s32.totalorder %s158, %s160
      %p164 = scmp.eq.s32.totalorder %s19, 0
      %p165 = por %p163, %p164
      %p166 = scmp.ne.s32.totalorder %s158, %s160
      %p167 = scmp.eq.s32.totalorder %s24, 1
      %p168 = por %p166, %p167
      %p169 = scmp.ne.s32.totalorder %s160, %s161
      %p170 = scmp.eq.s32.totalorder %s24, 0
      %p171 = por %p169, %p170
      %p172 = scmp.ne.s32.totalorder %s160, %s161
      %p173 = scmp.eq.s32.totalorder %s25, 1
      %p174 = por %p172, %p173
      %p176 = scmp.ne.s32.totalorder %s161, %s175
      %p177 = scmp.eq.s32.totalorder %s25, 0
      %p178 = por %p176, %p177
      %s180 = sadd.s32 %s179, 1
      %p183 = scmp.eq.s32.totalorder %s19, 1
      %p184 = scmp.ne.s32.totalorder %s179, %s181
      %p185 = scmp.eq.s32.totalorder %s19, 0
      %p186 = por %p184, %p185
      %p187 = scmp.ne.s32.totalorder %s179, %s181
      %p188 = scmp.eq.s32.totalorder %s24, 1
      %p189 = por %p187, %p188
      %p190 = scmp.ne.s32.totalorder %s181, %s182
      %p191 = scmp.eq.s32.totalorder %s24, 0
      %p192 = por %p190, %p191
      %p193 = scmp.ne.s32.totalorder %s181, %s182
      %p194 = scmp.eq.s32.totalorder %s25, 1
      %p195 = por %p193, %p194
      %p197 = scmp.ne.s32.totalorder %s182, %s196
      %p198 = scmp.eq.s32.totalorder %s25, 0
      %p199 = por %p197, %p198
      %s200 = ssub.s32 %s26, %s38
      %s201 = ssub.s32 %s27, %s34
      %s202 = sor.u32 %s200, %s201
      %p203 = scmp.eq.s32.totalorder %s202, 0
      %s205 = sadd.s32 %s204, 1
      %s206 = scalar_select %p203, %s204, %s205
      %p209 = pneg %p203
      %p210 = scmp.eq.s32.totalorder %s19, 1
      %p211 = por %p209, %p210
      %p212 = scmp.ne.s32.totalorder %s204, %s207
      %p213 = scmp.eq.s32.totalorder %s19, 0
      %p214 = por %p212, %p213
      %p215 = scmp.ne.s32.totalorder %s204, %s207
      %p216 = scmp.eq.s32.totalorder %s24, 1
      %p217 = por %p215, %p216
      %p218 = scmp.ne.s32.totalorder %s207, %s208
      %p219 = scmp.eq.s32.totalorder %s24, 0
      %p220 = por %p218, %p219
      %p221 = scmp.ne.s32.totalorder %s207, %s208
      %p222 = scmp.eq.s32.totalorder %s25, 1
      %p223 = por %p221, %p222
      %p225 = scmp.ne.s32.totalorder %s208, %s224
      %p226 = scmp.eq.s32.totalorder %s25, 0
      %p227 = por %p225, %p226
      %p228 = scmp.le.s32.totalorder 1, %s19
      %p229 = scmp.lt.s32.totalorder %s19, 3
      %p230 = pnand %p228, %p229
      %p231 = pneg %p230
      // Predicated region
      $region9: #{tpu_custom_call.1} parent=5 // pred_check
        _
      $region10: #{tpu_custom_call.1} parent=5 // pred_check_branch
        %233 = sbr.rel (%p230) target = $region12
      $region11: #{tpu_custom_call.1} parent=5 // pred_region
        %s234 = ssub.s32 %s19, 1
        // Predicated region
        $region13: #{tpu_custom_call.1} parent=11 // pred_check
          %p235 = pneg %p108
        $region14: #{tpu_custom_call.1} parent=11 // pred_check_branch
          %237 = sbr.rel (%p235) target = $region16
        $region15: #{tpu_custom_call.1} parent=11 // pred_region
          _
        $region16: #{tpu_custom_call.1} parent=11 // pred_fallthru
          _
        // Predicated region
        $region17: #{tpu_custom_call.1} parent=11 // pred_check
          %p238 = pneg %p129
        $region18: #{tpu_custom_call.1} parent=11 // pred_check_branch
          %240 = sbr.rel (%p238) target = $region20
        $region19: #{tpu_custom_call.1} parent=11 // pred_region
          _
        $region20: #{tpu_custom_call.1} parent=11 // pred_fallthru
          _
        // Predicated region
        $region21: #{tpu_custom_call.1} parent=11 // pred_check
          %p241 = pneg %p150
        $region22: #{tpu_custom_call.1} parent=11 // pred_check_branch
          %243 = sbr.rel (%p241) target = $region24
        $region23: #{tpu_custom_call.1} parent=11 // pred_region
          _
        $region24: #{tpu_custom_call.1} parent=11 // pred_fallthru
          _
        // Predicated region
        $region25: #{tpu_custom_call.1} parent=11 // pred_check
          %p244 = pneg %p171
        $region26: #{tpu_custom_call.1} parent=11 // pred_check_branch
          %246 = sbr.rel (%p244) target = $region28
        $region27: #{tpu_custom_call.1} parent=11 // pred_region
          _
        $region28: #{tpu_custom_call.1} parent=11 // pred_fallthru
          _
        // Predicated region
        $region29: #{tpu_custom_call.1} parent=11 // pred_check
          %p247 = pneg %p192
        $region30: #{tpu_custom_call.1} parent=11 // pred_check_branch
          %249 = sbr.rel (%p247) target = $region32
        $region31: #{tpu_custom_call.1} parent=11 // pred_region
          _
        $region32: #{tpu_custom_call.1} parent=11 // pred_fallthru
          _
      $region12: #{tpu_custom_call.1} parent=5 // pred_fallthru
        _
      %p250 = scmp.lt.s32.totalorder %s19, 2
      // Predicated region
      $region33: #{tpu_custom_call.1} parent=5 // pred_check
        %p251 = pneg %p250
      $region34: #{tpu_custom_call.1} parent=5 // pred_check_branch
        %253 = sbr.rel (%p251) target = $region36
      $region35: #{tpu_custom_call.1} parent=5 // pred_region
        // Predicated region
        $region37: #{tpu_custom_call.1} parent=35 // pred_check
          %p254 = pneg %p53
        $region38: #{tpu_custom_call.1} parent=35 // pred_check_branch
          %256 = sbr.rel (%p254) target = $region40
        $region39: #{tpu_custom_call.1} parent=35 // pred_region
          %s257 = smul.u32 2, %s27
          %p258 = scmp.lt.s32.totalorder %s26, 1
          %s259 = scalar_select %p258, %s26, 1
          %p260 = scmp.lt.s32.totalorder %s257, 1
          %s261 = scalar_select %p260, %s257, 1
          %s262 = smul.addr %s259, 2
          %s263 = sadd.s32 %s261, %s262
          %s264 = smul.addr %s263, 4
          %s265 = scalar_lea.vmem %s0, %s264
          %s266 = smul.u32 2, %s27
        $region40: #{tpu_custom_call.1} parent=35 // pred_fallthru
          _
        // Predicated region
        $region41: #{tpu_custom_call.1} parent=35 // pred_check
          %p267 = pneg %p81
        $region42: #{tpu_custom_call.1} parent=35 // pred_check_branch
          %269 = sbr.rel (%p267) target = $region44
        $region43: #{tpu_custom_call.1} parent=35 // pred_region
          %s270 = sand.u32 %s71, 1
          %s271 = scalar_lea.sflag [#allocation3], %s270
          %s272 = sand.u32 %s71, 1
          %s273 = smul.addr %s272, 16
          %s274 = scalar_lea.vmem [#allocation2], %s273
          %s275 = smul.u32 2, %s27
          %s277 = ssub.s32 256, 256
          %278 = vsyncadd %s271, %s277
          %s279 = smul.addr %s26, 2
          %s280 = sadd.s32 %s275, %s279
          %s281 = smul.addr %s280, 128
          %s282 = scalar_lea.hbm %s1, %s281
          %s284 = sshll.u32 %s274, 4
          %s285 = int_to_ptr.vmem [resolvable:$true] %s284
          %287 = dma.hbm_to_vmem [thread:$0]  %s282, 256, %s285, %s271
        $region44: #{tpu_custom_call.1} parent=35 // pred_fallthru
          _
      $region36: #{tpu_custom_call.1} parent=5 // pred_fallthru
        _
      %p288 = scmp.le.s32.totalorder 1, %s19
      %p289 = scmp.lt.s32.totalorder %s19, 3
      %p290 = pnand %p288, %p289
      %p291 = pneg %p290
      // Predicated region
      $region45: #{tpu_custom_call.1} parent=5 // pred_check
        _
      $region46: #{tpu_custom_call.1} parent=5 // pred_check_branch
        %293 = sbr.rel (%p290) target = $region48
      $region47: #{tpu_custom_call.1} parent=5 // pred_region
        %s294 = ssub.s32 %s19, 1
        %s295 = sand.u32 %s74, 1
        %s296 = scalar_lea.sflag [#allocation3], %s295
        %s297 = sand.u32 %s74, 1
        %s298 = smul.addr %s297, 16
        %s299 = scalar_lea.vmem [#allocation2], %s298
        // Predicated region
        $region49: #{tpu_custom_call.1} parent=47 // pred_check
          %p300 = pneg %p87
        $region50: #{tpu_custom_call.1} parent=47 // pred_check_branch
          %302 = sbr.rel (%p300) target = $region52
        $region51: #{tpu_custom_call.1} parent=47 // pred_region
          %303 = dma.done %s296, 256
        $region52: #{tpu_custom_call.1} parent=47 // pred_fallthru
          _
        %s304 = smul.u32 2, %s29
        %p305 = scmp.lt.s32.totalorder %s28, 1
        %s306 = scalar_select %p305, %s28, 1
        %p307 = scmp.lt.s32.totalorder %s304, 1
        %s308 = scalar_select %p307, %s304, 1
        %s309 = smul.addr %s306, 2
        %s310 = sadd.s32 %s308, %s309
        %s311 = smul.addr %s310, 4
        %s312 = scalar_lea.vmem %s0, %s311
        %p313 = pneg %p59
        %p314 = pneg %p56
        %s315 = sand.u32 %s74, 1
        %s316 = scalar_lea.sflag [#allocation3], %s315
        %s317 = sand.u32 %s74, 1
        %s318 = smul.addr %s317, 16
        %s319 = scalar_lea.vmem [#allocation2], %s318
        %p320 = pneg %p87
        %p321 = pneg %p84
        %p322 = pneg %p108
        %p323 = pneg %p105
        %p324 = pneg %p129
        %p325 = pneg %p126
        %p326 = pneg %p150
        %p327 = pneg %p147
        %p328 = pneg %p171
        %p329 = pneg %p168
        %p330 = pneg %p192
        %p331 = pneg %p189
        %p332 = pneg %p220
        %p333 = pneg %p217
        %s334 = sand.u32 %s207, 1
        %s335 = scalar_lea.sflag [#allocation4], %s334
        %s336 = sand.u32 %s207, 1
        %s337 = smul.addr %s336, 16
        %s338 = scalar_lea.vmem [#allocation5], %s337
        %s339 = smul.u32 2, %s29
        %p340 = scmp.lt.s32.totalorder %s28, 1
        %s341 = scalar_select %p340, %s28, 1
        %p342 = scmp.lt.s32.totalorder %s339, 1
        %s343 = scalar_select %p342, %s339, 1
        %s344 = smul.addr %s341, 2
        %s345 = sadd.s32 %s343, %s344
        %s346 = smul.addr %s345, 4
        %s347 = scalar_lea.vmem %s0, %s346
        %s348 = smul.u32 2, %s29
        %s349 = smul.u32 2, %s29
        %s350 = smul.u32 2, %s29
        %v351 = vld [vmem:[%s347] sm:$0xff]
        %v352 = vld [vmem:[%s299] sm:$0xff]
        %v353 = vld [vmem:[%s299 + $0x8] sm:$0xff]
        %v354 = vld [vmem:[%s2] sm:$0xff]
        %v355 = vld [vmem:[%s3] sm:$0xff]
        %vm356 = vcmask 64512
        %v358 = vsel %vm356, %v355, 0
        %360 = vmatprep.subr.mxu0 0.0
        %361 = vmatpush1.msra.mxu0 0.0
        %362 = vmatprep.subr.mxu0 0.0
        %363 = vmatpush1.msra.mxu0 0.0
        %364 = vmatprep.subr.mxu0 0.0
        %365 = vmatpush1.msra.mxu0 0.0
        %366 = vmatprep.subr.mxu0 0.0
        %367 = vmatpush1.msra.mxu0 0.0
        %368 = vmatprep.subr.mxu0 0.0
        %369 = vmatpush1.msra.mxu0 0.0
        %370 = vmatprep.subr.mxu0 0.0
        %371 = vmatpush1.msra.mxu0 0.0
        %372 = vmatprep.subr.mxu0 0.0
        %373 = vmatpush1.msra.mxu0 0.0
        %374 = vmatprep.subr.mxu0 0.0
        %375 = vmatpush1.msra.mxu0 0.0
        %376 = vmatprep.subr.mxu0 0.0
        %377 = vmatpush1.msra.mxu0 0.0
        %378 = vmatprep.subr.mxu0 0.0
        %379 = vmatpush1.msra.mxu0 0.0
        %380 = vmatprep.subr.mxu0 0.0
        %381 = vmatpush1.msra.mxu0 0.0
        %382 = vmatprep.subr.mxu0 0.0
        %383 = vmatpush1.msra.mxu0 0.0
        %384 = vmatprep.subr.mxu0 0.0
        %385 = vmatpush1.msra.mxu0 0.0
        %386 = vmatprep.subr.mxu0 0.0
        %387 = vmatpush1.msra.mxu0 0.0
        %388 = vmatprep.subr.mxu0 0.0
        %389 = vmatpush1.msra.mxu0 0.0
        %390 = vmatprep.subr.mxu0 %v353
        %391 = vmatpush1.msra.mxu0 %v352
        %392 = vmatprep.subr.mxu0 0.0
        %393 = vmatpush2.msra.mxu0 0.0
        %394 = vmatprep.subr.mxu0 0.0
        %395 = vmatpush2.msra.mxu0 0.0
        %396 = vmatprep.subr.mxu0 0.0
        %397 = vmatpush2.msra.mxu0 0.0
        %398 = vmatprep.subr.mxu0 0.0
        %399 = vmatpush2.msra.mxu0 0.0
        %400 = vmatprep.subr.mxu0 0.0
        %401 = vmatpush2.msra.mxu0 0.0
        %402 = vmatprep.subr.mxu0 0.0
        %403 = vmatpush2.msra.mxu0 0.0
        %404 = vmatprep.subr.mxu0 0.0
        %405 = vmatpush2.msra.mxu0 0.0
        %406 = vmatprep.subr.mxu0 0.0
        %407 = vmatpush2.msra.mxu0 0.0
        %408 = vmatprep.subr.mxu0 0.0
        %409 = vmatpush2.msra.mxu0 0.0
        %410 = vmatprep.subr.mxu0 0.0
        %411 = vmatpush2.msra.mxu0 0.0
        %412 = vmatprep.subr.mxu0 0.0
        %413 = vmatpush2.msra.mxu0 0.0
        %414 = vmatprep.subr.mxu0 0.0
        %415 = vmatpush2.msra.mxu0 0.0
        %416 = vmatprep.subr.mxu0 0.0
        %417 = vmatpush2.msra.mxu0 0.0
        %418 = vmatprep.subr.mxu0 0.0
        %419 = vmatpush2.msra.mxu0 0.0
        %420 = vmatprep.subr.mxu0 0.0
        %421 = vmatpush2.msra.mxu0 0.0
        %422 = vmatprep.subr.mxu0 0.0
        %423 = vmatpush2.msra.mxu0 0.0
        %424 = vmatprep.mubr.f32.mxu0 0.0
        %425 = vmatmul.mubr.f32.gmra.mxu0 %v358
        %v426 = vpop.f32.mrf.mxu0
        %v427 = vadd.f32 0.0, %v426
        %v428 = vpop.f32.mrf.mxu0
        %v429 = vadd.f32 0.0, %v428
        %430 = vdwg.mxu0
        %v432 = vcombine.high %v351, %v351
        %vm433 = vcmask 31744
        %v435 = vsel %vm433, %v354, 0
        %vm437 = vcmask 1043456
        %v438 = vsel %vm437, %v351, 0
        %v440 = vsel %vm437, %v432, 0
        %442 = vmatprep.subr.mxu0 0.0
        %443 = vmatpush1.msra.mxu0 0.0
        %444 = vmatprep.subr.mxu0 0.0
        %445 = vmatpush1.msra.mxu0 0.0
        %446 = vmatprep.subr.mxu0 0.0
        %447 = vmatpush1.msra.mxu0 0.0
        %448 = vmatprep.subr.mxu0 0.0
        %449 = vmatpush1.msra.mxu0 0.0
        %450 = vmatprep.subr.mxu0 0.0
        %451 = vmatpush1.msra.mxu0 0.0
        %452 = vmatprep.subr.mxu0 0.0
        %453 = vmatpush1.msra.mxu0 0.0
        %454 = vmatprep.subr.mxu0 0.0
        %455 = vmatpush1.msra.mxu0 0.0
        %456 = vmatprep.subr.mxu0 0.0
        %457 = vmatpush1.msra.mxu0 0.0
        %458 = vmatprep.subr.mxu0 0.0
        %459 = vmatpush1.msra.mxu0 0.0
        %460 = vmatprep.subr.mxu0 0.0
        %461 = vmatpush1.msra.mxu0 0.0
        %462 = vmatprep.subr.mxu0 0.0
        %463 = vmatpush1.msra.mxu0 0.0
        %464 = vmatprep.subr.mxu0 0.0
        %465 = vmatpush1.msra.mxu0 0.0
        %466 = vmatprep.subr.mxu0 0.0
        %467 = vmatpush1.msra.mxu0 0.0
        %468 = vmatprep.subr.mxu0 0.0
        %469 = vmatpush1.msra.mxu0 0.0
        %470 = vmatprep.subr.mxu0 0.0
        %471 = vmatpush1.msra.mxu0 0.0
        %472 = vmatprep.subr.mxu0 %v440
        %473 = vmatpush1.msra.mxu0 %v438
        %474 = vmatprep.subr.mxu0 0.0
        %475 = vmatpush2.msra.mxu0 0.0
        %476 = vmatprep.subr.mxu0 0.0
        %477 = vmatpush2.msra.mxu0 0.0
        %478 = vmatprep.subr.mxu0 0.0
        %479 = vmatpush2.msra.mxu0 0.0
        %480 = vmatprep.subr.mxu0 0.0
        %481 = vmatpush2.msra.mxu0 0.0
        %482 = vmatprep.subr.mxu0 0.0
        %483 = vmatpush2.msra.mxu0 0.0
        %484 = vmatprep.subr.mxu0 0.0
        %485 = vmatpush2.msra.mxu0 0.0
        %486 = vmatprep.subr.mxu0 0.0
        %487 = vmatpush2.msra.mxu0 0.0
        %488 = vmatprep.subr.mxu0 0.0
        %489 = vmatpush2.msra.mxu0 0.0
        %490 = vmatprep.subr.mxu0 0.0
        %491 = vmatpush2.msra.mxu0 0.0
        %492 = vmatprep.subr.mxu0 0.0
        %493 = vmatpush2.msra.mxu0 0.0
        %494 = vmatprep.subr.mxu0 0.0
        %495 = vmatpush2.msra.mxu0 0.0
        %496 = vmatprep.subr.mxu0 0.0
        %497 = vmatpush2.msra.mxu0 0.0
        %498 = vmatprep.subr.mxu0 0.0
        %499 = vmatpush2.msra.mxu0 0.0
        %500 = vmatprep.subr.mxu0 0.0
        %501 = vmatpush2.msra.mxu0 0.0
        %502 = vmatprep.subr.mxu0 0.0
        %503 = vmatpush2.msra.mxu0 0.0
        %504 = vmatprep.subr.mxu0 0.0
        %505 = vmatpush2.msra.mxu0 0.0
        %506 = vmatprep.mubr.f32.mxu0 0.0
        %507 = vmatmul.mubr.f32.gmra.mxu0 %v435
        %v508 = vpop.f32.mrf.mxu0
        %v509 = vadd.f32 %v427, %v508
        %v510 = vpop.f32.mrf.mxu0
        %v511 = vadd.f32 %v429, %v510
        %512 = vdwg.mxu0
        %v513 = vld [vmem:[%s4] sm:$0xff]
        %515 = vset.pattern.permute.xlu0 0
        %516 = vperm.xlu0 %515, %v513
        %v517 = vpop.permute.xlu0 %516
        %v519 = vadd.f32 %v509, %v517
        %v520 = vadd.f32 %v511, %v517
        %v521 = vmax.f32 %v519, 0.0
        %v522 = vmax.f32 %v520, 0.0
        %v523 = vld [vmem:[%s5] sm:$0xff]
        %v524 = vld [vmem:[%s6] sm:$0xff]
        %526 = vset.pattern.permute.xlu0 0
        %527 = vperm.xlu0 %526, %v524
        %v528 = vpop.permute.xlu0 %527
        %v531 = vsel %vm356, %v523, 0
        %533 = vmatprep.subr.mxu0 0.0
        %534 = vmatpush1.msra.mxu0 0.0
        %535 = vmatprep.subr.mxu0 0.0
        %536 = vmatpush1.msra.mxu0 0.0
        %537 = vmatprep.subr.mxu0 0.0
        %538 = vmatpush1.msra.mxu0 0.0
        %539 = vmatprep.subr.mxu0 0.0
        %540 = vmatpush1.msra.mxu0 0.0
        %541 = vmatprep.subr.mxu0 0.0
        %542 = vmatpush1.msra.mxu0 0.0
        %543 = vmatprep.subr.mxu0 0.0
        %544 = vmatpush1.msra.mxu0 0.0
        %545 = vmatprep.subr.mxu0 0.0
        %546 = vmatpush1.msra.mxu0 0.0
        %547 = vmatprep.subr.mxu0 0.0
        %548 = vmatpush1.msra.mxu0 0.0
        %549 = vmatprep.subr.mxu0 0.0
        %550 = vmatpush1.msra.mxu0 0.0
        %551 = vmatprep.subr.mxu0 0.0
        %552 = vmatpush1.msra.mxu0 0.0
        %553 = vmatprep.subr.mxu0 0.0
        %554 = vmatpush1.msra.mxu0 0.0
        %555 = vmatprep.subr.mxu0 0.0
        %556 = vmatpush1.msra.mxu0 0.0
        %557 = vmatprep.subr.mxu0 0.0
        %558 = vmatpush1.msra.mxu0 0.0
        %559 = vmatprep.subr.mxu0 0.0
        %560 = vmatpush1.msra.mxu0 0.0
        %561 = vmatprep.subr.mxu0 0.0
        %562 = vmatpush1.msra.mxu0 0.0
        %563 = vmatprep.subr.mxu0 %v522
        %564 = vmatpush1.msra.mxu0 %v521
        %565 = vmatprep.subr.mxu0 0.0
        %566 = vmatpush2.msra.mxu0 0.0
        %567 = vmatprep.subr.mxu0 0.0
        %568 = vmatpush2.msra.mxu0 0.0
        %569 = vmatprep.subr.mxu0 0.0
        %570 = vmatpush2.msra.mxu0 0.0
        %571 = vmatprep.subr.mxu0 0.0
        %572 = vmatpush2.msra.mxu0 0.0
        %573 = vmatprep.subr.mxu0 0.0
        %574 = vmatpush2.msra.mxu0 0.0
        %575 = vmatprep.subr.mxu0 0.0
        %576 = vmatpush2.msra.mxu0 0.0
        %577 = vmatprep.subr.mxu0 0.0
        %578 = vmatpush2.msra.mxu0 0.0
        %579 = vmatprep.subr.mxu0 0.0
        %580 = vmatpush2.msra.mxu0 0.0
        %581 = vmatprep.subr.mxu0 0.0
        %582 = vmatpush2.msra.mxu0 0.0
        %583 = vmatprep.subr.mxu0 0.0
        %584 = vmatpush2.msra.mxu0 0.0
        %585 = vmatprep.subr.mxu0 0.0
        %586 = vmatpush2.msra.mxu0 0.0
        %587 = vmatprep.subr.mxu0 0.0
        %588 = vmatpush2.msra.mxu0 0.0
        %589 = vmatprep.subr.mxu0 0.0
        %590 = vmatpush2.msra.mxu0 0.0
        %591 = vmatprep.subr.mxu0 0.0
        %592 = vmatpush2.msra.mxu0 0.0
        %593 = vmatprep.subr.mxu0 0.0
        %594 = vmatpush2.msra.mxu0 0.0
        %595 = vmatprep.subr.mxu0 0.0
        %596 = vmatpush2.msra.mxu0 0.0
        %597 = vmatprep.mubr.f32.mxu0 0.0
        %598 = vmatmul.mubr.f32.gmra.mxu0 %v531
        %v599 = vpop.f32.mrf.mxu0
        %v600 = vadd.f32 %v528, %v599
        %v601 = vpop.f32.mrf.mxu0
        %v602 = vadd.f32 %v528, %v601
        %603 = vdwg.mxu0
        %v604 = vxor.u32 %v600, 2147483648
        %v605 = vxor.u32 %v602, 2147483648
        %v606 = vmul.f32 %v604, 1.442695
        %v607 = vpow.pop %v606
        %v608 = vmul.f32 %v605, 1.442695
        %v609 = vpow.pop %v608
        %v610 = vadd.f32 %v607, 1.0
        %v611 = vadd.f32 %v609, 1.0
        %v612 = vrcp.pop %v610
        %v613 = vmul.f32 1.0, %v612
        %v614 = vrcp.pop %v611
        %v615 = vmul.f32 1.0, %v614
        %v616 = vmul.f32 %v613, %v352
        %v617 = vmul.f32 %v615, %v353
        %618 = vst [vmem:[%s338] sm:$0xff] %v616
        %619 = vst [vmem:[%s338 + $0x8] sm:$0xff] %v617
        %s620 = sand.u32 %s207, 1
        %s621 = scalar_lea.sflag [#allocation4], %s620
        %s622 = sand.u32 %s207, 1
        %s623 = smul.addr %s622, 16
        %s624 = scalar_lea.vmem [#allocation5], %s623
        // Predicated region
        $region53: #{tpu_custom_call.1} parent=47 // pred_check
          %p625 = pneg %p217
        $region54: #{tpu_custom_call.1} parent=47 // pred_check_branch
          %627 = sbr.rel (%p625) target = $region56
        $region55: #{tpu_custom_call.1} parent=47 // pred_region
          %s628 = smul.u32 2, %s29
          %s630 = ssub.s32 256, 256
          %631 = vsyncadd %s621, %s630
          %s632 = smul.addr %s28, 2
          %s633 = sadd.s32 %s628, %s632
          %s634 = smul.addr %s633, 128
          %s635 = scalar_lea.hbm %s7, %s634
          %s637 = sshll.u32 %s624, 4
          %s638 = int_to_ptr.vmem [resolvable:$true] %s637
          %640 = dma.vmem_to_hbm [thread:$0]  %s638, 256, %s635, %s621
        $region56: #{tpu_custom_call.1} parent=47 // pred_fallthru
          _
      $region48: #{tpu_custom_call.1} parent=5 // pred_fallthru
        _
      %p641 = scmp.le.s32.totalorder 2, %s19
      // Predicated region
      $region57: #{tpu_custom_call.1} parent=5 // pred_check
        %p642 = pneg %p641
      $region58: #{tpu_custom_call.1} parent=5 // pred_check_branch
        %644 = sbr.rel (%p642) target = $region60
      $region59: #{tpu_custom_call.1} parent=5 // pred_region
        %s645 = ssub.s32 %s19, 2
        // Predicated region
        $region61: #{tpu_custom_call.1} parent=59 // pred_check
          %p646 = pneg %p223
        $region62: #{tpu_custom_call.1} parent=59 // pred_check_branch
          %648 = sbr.rel (%p646) target = $region64
        $region63: #{tpu_custom_call.1} parent=59 // pred_region
          %s649 = sand.u32 %s208, 1
          %s650 = scalar_lea.sflag [#allocation4], %s649
          %s651 = sand.u32 %s208, 1
          %s652 = smul.addr %s651, 16
          %s653 = scalar_lea.vmem [#allocation5], %s652
          %654 = dma.done %s650, 256
        $region64: #{tpu_custom_call.1} parent=59 // pred_fallthru
          _
      $region60: #{tpu_custom_call.1} parent=5 // pred_fallthru
        _
    $region6: #{tpu_custom_call.1} parent=1 // loop_footer
      %s23 = sadd.s32 1, %s19
    $region7: #{tpu_custom_call.1} parent=1 // loop_footer_branch
      %18 = sbr.rel target = $region3
    $region8: #{tpu_custom_call.1} parent=1 // loop_exit
      _
    %655 = vsyncpa [#allocation3], 1
    %s656 = scalar_lea.sflag [#allocation3], 1
    %657 = vsyncpa %s656, 1
    %658 = vsyncpa [#allocation4], 1
    %s659 = scalar_lea.sflag [#allocation4], 1
    %660 = vsyncpa %s659, 1

</llo_original>
